<compile_context>
chip_gen: v7x
topology: tpu7x:2x2x1
jax: 0.10.0
libtpu: 0.0.40
codegen_flags: <defaults>
</compile_context>

<pallas_src>
import math

import jax
import jax.numpy as jnp
from jax.experimental import pallas as pl
from jax.experimental.pallas import tpu as pltpu

NUM_HEADS = 8


def _plan_batch(batch, in_row_bytes, out_row_bytes):
    """Pick (batch_tile, padded_batch).

    * tile is a multiple of 8 (f32 sublane) so every load/store is unmasked,
    * as large as fits a conservative double-buffered VMEM budget (fewest grid
      steps -> amortize the ~0.35us/step overhead; v5e/v6e are single-TC),
    * 2 steps when there is plenty of work so both v7x TensorCores get a share.
    """
    budget = 16 * 1024 * 1024                       # per-step tile budget
    per_row = 2 * (in_row_bytes + out_row_bytes)    # double-buffered in + out
    max_rows = max(8, min(8192, (budget // per_row) // 8 * 8))
    b8 = -(-batch // 8) * 8
    if b8 <= max_rows:
        tile = b8 if b8 < 1024 else -(-b8 // 16) * 8   # 1 step small, 2 steps big
    else:
        tile = max_rows
    padded = -(-b8 // tile) * tile
    return tile, padded


def _make_kernel(num_modalities, num_heads, output_dim):
    M, H, D = num_modalities, num_heads, output_dim
    MH, MD = M * H, M * D

    def kernel(x_ref, w1_ref, sel_ref, wo_ref, bo_ref, o_ref):
        # One lane-dense matmul: [values | scores] for every modality at once.
        big = jnp.dot(x_ref[...], w1_ref[...],
                      preferred_element_type=jnp.float32)          # (TB, MD+MH)
        vals = big[:, :MD]                                          # (TB, M*D)
        scores = [big[:, MD + m * H: MD + (m + 1) * H] for m in range(M)]

        # Softmax over modalities, independently per (row, head) -- pure VPU/EUP.
        smax = scores[0]
        for s in scores[1:]:
            smax = jnp.maximum(smax, s)
        exps = [jnp.exp(s - smax) for s in scores]
        denom = exps[0]
        for e in exps[1:]:
            denom = denom + e
        inv = pl.reciprocal(denom, approx=True)                     # EUP slot
        attn = jnp.concatenate([e * inv for e in exps], axis=1)     # (TB, M*H)

        # Head -> feature expansion (block-diagonal one-hot), combine with values,
        # and fold the sum over modalities into the (replicated) output projection.
        attn_full = jnp.dot(attn, sel_ref[...],
                            preferred_element_type=jnp.float32)     # (TB, M*D)
        out = jnp.dot(attn_full * vals, wo_ref[...],
                      preferred_element_type=jnp.float32) + bo_ref[...]
        o_ref[...] = out

    return kernel


def attention_fusion_forward(modalities, proj_params, in_proj_w, in_proj_b,
                             out_w, out_b, fusion_query, num_heads=NUM_HEADS):
    """Fused AttentionFusion forward (eval mode).

    modalities:   list of (B, d_m) float32 arrays
    proj_params:  list of (Wp_m (D, d_m), bp_m (D,))
    in_proj_w:    (3D, D)  packed [Wq; Wk; Wv]
    in_proj_b:    (3D,)    packed [bq; bk; bv]
    out_w, out_b: (D, D), (D,)
    fusion_query: (1, 1, D)
    returns: (B, D)
    """
    M = len(modalities)
    B = modalities[0].shape[0]
    D = out_w.shape[0]
    H = num_heads
    assert D % H == 0, "output_dim must be divisible by num_heads"
    hd = D // H
    scale = 1.0 / math.sqrt(hd)
    dims = [x.shape[1] for x in modalities]
    Dsum = sum(dims)
    MH, MD = M * H, M * D

    wq, wk, wv = in_proj_w[:D], in_proj_w[D:2 * D], in_proj_w[2 * D:]
    bq, bk, bv = in_proj_b[:D], in_proj_b[D:2 * D], in_proj_b[2 * D:]

    # Batch-independent fusion query, fully projected once (constant-folds under jit).
    q = fusion_query.reshape(D) @ wq.T + bq                          # (D,)

    # One-hot head selector: sel[d, h] = 1 iff feature d belongs to head h.
    sel = jnp.zeros((D, H), jnp.float32).at[
        jnp.arange(D), jnp.arange(D) // hd].set(1.0)                 # (D, H)

    # ---- pack all folded weights into a few lane-dense slabs --------------------
    # W1: (Dsum+1, M*D + M*H), block-structured; last row carries the biases
    # (x_cat gets a trailing ones column); column layout is [values | scores].
    W1 = jnp.zeros((Dsum + 1, MD + MH), jnp.float32)
    off = 0
    for m, (Wp, bp_m) in enumerate(proj_params):
        d_m = Wp.shape[1]
        wk_f = wk @ Wp                                               # (D, d_m)
        bk_f = wk @ bp_m + bk                                        # (D,)
        wv_f = wv @ Wp                                               # (D, d_m)
        bv_f = wv @ bp_m + bv                                        # (D,)
        score_w = scale * (wk_f.T @ (q[:, None] * sel))              # (d_m, H)
        score_b = scale * ((q * bk_f) @ sel)                         # (H,)
        W1 = W1.at[off:off + d_m, m * D:(m + 1) * D].set(wv_f.T)
        W1 = W1.at[Dsum, m * D:(m + 1) * D].set(bv_f)
        W1 = W1.at[off:off + d_m, MD + m * H:MD + (m + 1) * H].set(score_w)
        W1 = W1.at[Dsum, MD + m * H:MD + (m + 1) * H].set(score_b)
        off += d_m

    # Block-diagonal head->feature expander (M*H, M*D).
    SEL = jnp.zeros((MH, MD), jnp.float32)
    for m in range(M):
        SEL = SEL.at[m * H:(m + 1) * H, m * D:(m + 1) * D].set(sel.T)

    # Output projection replicated per modality: folds the over-modality sum.
    WO = jnp.tile(out_w.T, (M, 1))                                   # (M*D, D)
    BO = out_b.reshape(1, D)

    # Single concatenated input stream; trailing ones column drives the bias row.
    x_cat = jnp.concatenate(
        [x.astype(jnp.float32) for x in modalities]
        + [jnp.ones((B, 1), jnp.float32)], axis=1)                   # (B, Dsum+1)

    TB, Bp = _plan_batch(B, 4 * (Dsum + 1), 4 * D)
    if Bp > B:
        x_cat = jnp.pad(x_cat, ((0, Bp - B), (0, 0)))                # zero rows are benign

    out = pl.pallas_call(
        _make_kernel(M, H, D),
        out_shape=jax.ShapeDtypeStruct((Bp, D), jnp.float32),
        grid=(Bp // TB,),
        in_specs=[
            pl.BlockSpec((TB, Dsum + 1), lambda i: (i, 0)),
            pl.BlockSpec(W1.shape, lambda i: (0, 0)),
            pl.BlockSpec(SEL.shape, lambda i: (0, 0)),
            pl.BlockSpec(WO.shape, lambda i: (0, 0)),
            pl.BlockSpec(BO.shape, lambda i: (0, 0)),
        ],
        out_specs=pl.BlockSpec((TB, D), lambda i: (i, 0)),
        compiler_params=pltpu.CompilerParams(
            dimension_semantics=("parallel",),
            vmem_limit_bytes=40 * 1024 * 1024),
    )(x_cat, W1, SEL, WO, BO)
    return out[:B]


# TODO(synk): MultiheadAttention dropout(p=0.1) omitted — it is a no-op in eval/inference mode.


if __name__ == "__main__":
    B = 2
    input_dims = [48, 64]            # two modalities with different feature dims
    D = 32                           # output_dim, divisible by num_heads=8
    H = NUM_HEADS
    hd = D // H

    key = jax.random.PRNGKey(0)
    ks = jax.random.split(key, 16)

    # deterministic example inputs
    modalities = [jax.random.normal(ks[i], (B, d), jnp.float32)
                  for i, d in enumerate(input_dims)]

    # deterministic parameter init (shapes follow the nn.Module __init__)
    proj_params = []
    kidx = 4
    for d in input_dims:
        W = jax.random.normal(ks[kidx], (D, d), jnp.float32) * (1.0 / math.sqrt(d)); kidx += 1
        b = jax.random.normal(ks[kidx], (D,), jnp.float32) * 0.01; kidx += 1
        proj_params.append((W, b))
    in_proj_w = jax.random.normal(ks[kidx], (3 * D, D), jnp.float32) * (1.0 / math.sqrt(D)); kidx += 1
    in_proj_b = jax.random.normal(ks[kidx], (3 * D,), jnp.float32) * 0.01; kidx += 1
    out_w = jax.random.normal(ks[kidx], (D, D), jnp.float32) * (1.0 / math.sqrt(D)); kidx += 1
    out_b = jax.random.normal(ks[kidx], (D,), jnp.float32) * 0.01; kidx += 1
    fusion_query = jax.random.normal(ks[kidx], (1, 1, D), jnp.float32) * 0.02; kidx += 1

    # single fused Pallas kernel for the full forward pass
    fused = attention_fusion_forward(modalities, proj_params, in_proj_w, in_proj_b,
                                     out_w, out_b, fusion_query)
    fused = jax.block_until_ready(fused)

    # pure-JAX reference (same math as torch.nn.MultiheadAttention, eval mode)
    wq, wk, wv = in_proj_w[:D], in_proj_w[D:2 * D], in_proj_w[2 * D:]
    bq, bk, bv = in_proj_b[:D], in_proj_b[D:2 * D], in_proj_b[2 * D:]

    def reference():
        proj = [x @ W.T + b for (W, b), x in zip(proj_params, modalities)]
        st = jnp.stack(proj, axis=1)                          # (B, M, D)
        q = fusion_query.reshape(1, D) @ wq.T + bq            # (1, D)
        k = st @ wk.T + bk                                    # (B, M, D)
        v = st @ wv.T + bv
        qh = q.reshape(1, H, hd)
        kh = k.reshape(B, -1, H, hd)
        vh = v.reshape(B, -1, H, hd)
        scores = jnp.einsum('qhd,bmhd->bhm', qh, kh) / math.sqrt(hd)
        attn = jax.nn.softmax(scores, axis=-1)
        ctx = jnp.einsum('bhm,bmhd->bhd', attn, vh).reshape(B, D)
        return ctx @ out_w.T + out_b

    ref = reference()
    assert fused.shape == (B, D)
    # 2e-3 tolerance: approx-reciprocal softmax denominator + algebraic weight folding.
    assert jnp.allclose(fused, ref, atol=2e-3, rtol=2e-3), \
        float(jnp.max(jnp.abs(fused - ref)))
    print("KERNEL_OK")
</pallas_src>

<mosaic_0001>
module attributes {stable_mosaic.version = 11 : i64} {
  func.func @kernel(%arg0: i32, %arg1: memref<8x113xf32, #tpu.memory_space<vmem>>, %arg2: memref<113x80xf32, #tpu.memory_space<vmem>>, %arg3: memref<16x64xf32, #tpu.memory_space<vmem>>, %arg4: memref<64x32xf32, #tpu.memory_space<vmem>>, %arg5: memref<1x32xf32, #tpu.memory_space<vmem>>, %arg6: memref<8x32xf32, #tpu.memory_space<vmem>>) attributes {dimension_semantics = [#tpu.dimension_semantics<parallel>], iteration_bounds = array<i64: 1>, scalar_prefetch = 0 : i64, scratch_operands = 0 : i64, tpu.core_type = #tpu.core_type<tc>, window_params = [{transform_indices = @transform_0, window_bounds = array<i64: 8, 113>}, {pipeline_mode = #tpu.pipeline_mode<synchronous>, transform_indices = @transform_1, window_bounds = array<i64: 113, 80>}, {pipeline_mode = #tpu.pipeline_mode<synchronous>, transform_indices = @transform_2, window_bounds = array<i64: 16, 64>}, {pipeline_mode = #tpu.pipeline_mode<synchronous>, transform_indices = @transform_3, window_bounds = array<i64: 64, 32>}, {pipeline_mode = #tpu.pipeline_mode<synchronous>, transform_indices = @transform_4, window_bounds = array<i64: 1, 32>}, {transform_indices = @transform_5, window_bounds = array<i64: 8, 32>}]} {
    %c0 = arith.constant 0 : index
    %c0_0 = arith.constant 0 : index
    %0 = vector.load %arg1[%c0, %c0_0] : memref<8x113xf32, #tpu.memory_space<vmem>>, vector<8x113xf32>
    %c0_1 = arith.constant 0 : index
    %c0_2 = arith.constant 0 : index
    %1 = vector.load %arg2[%c0_1, %c0_2] : memref<113x80xf32, #tpu.memory_space<vmem>>, vector<113x80xf32>
    %cst = arith.constant dense<0.000000e+00> : vector<8x80xf32>
    %2 = tpu.matmul %0, %1, %cst {dimension_numbers = #tpu.dot_dimension_numbers<[1], [0], [0], [1], [0, 0, 1, 1], [], []>} : vector<8x113xf32>, vector<113x80xf32>, vector<8x80xf32> -> vector<8x80xf32>
    %3 = vector.extract_strided_slice %2 {offsets = [0, 0], sizes = [8, 64], strides = [1, 1]} : vector<8x80xf32> to vector<8x64xf32>
    %4 = vector.extract_strided_slice %2 {offsets = [0, 64], sizes = [8, 8], strides = [1, 1]} : vector<8x80xf32> to vector<8x8xf32>
    %5 = vector.extract_strided_slice %2 {offsets = [0, 72], sizes = [8, 8], strides = [1, 1]} : vector<8x80xf32> to vector<8x8xf32>
    %6 = arith.maximumf %4, %5 : vector<8x8xf32>
    %7 = arith.subf %4, %6 : vector<8x8xf32>
    %8 = math.exp %7 : vector<8x8xf32>
    %9 = arith.subf %5, %6 : vector<8x8xf32>
    %10 = math.exp %9 : vector<8x8xf32>
    %11 = arith.addf %8, %10 : vector<8x8xf32>
    %12 = tpu.reciprocal %11 {approx = true} : vector<8x8xf32> -> vector<8x8xf32>
    %13 = arith.mulf %8, %12 : vector<8x8xf32>
    %14 = arith.mulf %10, %12 : vector<8x8xf32>
    %15 = tpu.concatenate %13, %14 in 1 : vector<8x8xf32>, vector<8x8xf32> -> vector<8x16xf32>
    %c0_3 = arith.constant 0 : index
    %c0_4 = arith.constant 0 : index
    %16 = vector.load %arg3[%c0_3, %c0_4] : memref<16x64xf32, #tpu.memory_space<vmem>>, vector<16x64xf32>
    %cst_5 = arith.constant dense<0.000000e+00> : vector<8x64xf32>
    %17 = tpu.matmul %15, %16, %cst_5 {dimension_numbers = #tpu.dot_dimension_numbers<[1], [0], [0], [1], [0, 0, 1, 1], [], []>} : vector<8x16xf32>, vector<16x64xf32>, vector<8x64xf32> -> vector<8x64xf32>
    %18 = arith.mulf %17, %3 : vector<8x64xf32>
    %c0_6 = arith.constant 0 : index
    %c0_7 = arith.constant 0 : index
    %19 = vector.load %arg4[%c0_6, %c0_7] : memref<64x32xf32, #tpu.memory_space<vmem>>, vector<64x32xf32>
    %cst_8 = arith.constant dense<0.000000e+00> : vector<8x32xf32>
    %20 = tpu.matmul %18, %19, %cst_8 {dimension_numbers = #tpu.dot_dimension_numbers<[1], [0], [0], [1], [0, 0, 1, 1], [], []>} : vector<8x64xf32>, vector<64x32xf32>, vector<8x32xf32> -> vector<8x32xf32>
    %c0_9 = arith.constant 0 : index
    %c0_10 = arith.constant 0 : index
    %21 = vector.load %arg5[%c0_9, %c0_10] : memref<1x32xf32, #tpu.memory_space<vmem>>, vector<1x32xf32>
    %22 = vector.broadcast %21 : vector<1x32xf32> to vector<8x32xf32>
    %23 = arith.addf %20, %22 : vector<8x32xf32>
    %c0_11 = arith.constant 0 : index
    %c0_12 = arith.constant 0 : index
    %24 = vector.load %arg6[%c0_11, %c0_12] : memref<8x32xf32, #tpu.memory_space<vmem>>, vector<8x32xf32>
    tpu.vector_store %arg6[%c0_11, %c0_12], %23 {strides = array<i32>} : memref<8x32xf32, #tpu.memory_space<vmem>>, vector<8x32xf32>,
    return
  }
  func.func @transform_0(%arg0: i32) -> (i32, i32) {
    %c0_i32 = arith.constant 0 : i32
    %c0_i32_0 = arith.constant 0 : i32
    return %arg0, %c0_i32 : i32, i32
  }
  func.func @transform_1(%arg0: i32) -> (i32, i32) {
    %c0_i32 = arith.constant 0 : i32
    %c0_i32_0 = arith.constant 0 : i32
    %c0_i32_1 = arith.constant 0 : i32
    return %c0_i32, %c0_i32_0 : i32, i32
  }
  func.func @transform_2(%arg0: i32) -> (i32, i32) {
    %c0_i32 = arith.constant 0 : i32
    %c0_i32_0 = arith.constant 0 : i32
    %c0_i32_1 = arith.constant 0 : i32
    return %c0_i32, %c0_i32_0 : i32, i32
  }
  func.func @transform_3(%arg0: i32) -> (i32, i32) {
    %c0_i32 = arith.constant 0 : i32
    %c0_i32_0 = arith.constant 0 : i32
    %c0_i32_1 = arith.constant 0 : i32
    return %c0_i32, %c0_i32_0 : i32, i32
  }
  func.func @transform_4(%arg0: i32) -> (i32, i32) {
    %c0_i32 = arith.constant 0 : i32
    %c0_i32_0 = arith.constant 0 : i32
    %c0_i32_1 = arith.constant 0 : i32
    return %c0_i32, %c0_i32_0 : i32, i32
  }
  func.func @transform_5(%arg0: i32) -> (i32, i32) {
    %c0_i32 = arith.constant 0 : i32
    %c0_i32_0 = arith.constant 0 : i32
    return %arg0, %c0_i32 : i32, i32
  }
}

</mosaic_0001>

<llo_original>
// kernel: tpu_custom_call.1
$region0: #{tpu_custom_call.1}
  #allocation0 [shape = 'u32[]', space=smem, size = 0x4, offset = 0x4, fixed_abs, tag = 'smem constant byte address 0x4 - core index']
  #allocation1 [shape = 'u32[144,128]{1,0:T(1,128)}', space=vmem, size = 0x12000, scoped, tag = 'internal scratch']
  %s0 = inlined_call_operand.vmem [shape: f32[8,113], index: 0, kind: input, shape index: {}]
  %s1 = inlined_call_operand.vmem [shape: f32[113,80], index: 1, kind: input, shape index: {}]
  %s2 = inlined_call_operand.vmem [shape: f32[16,64], index: 2, kind: input, shape index: {}]
  %s3 = inlined_call_operand.vmem [shape: f32[64,32], index: 3, kind: input, shape index: {}]
  %s4 = inlined_call_operand.vmem [shape: f32[1,32], index: 4, kind: input, shape index: {}]
  %s5 = inlined_call_operand.hbm [shape: f32[8,32], index: 5, kind: output, shape index: {}]
  %s6 = sld [smem:[#allocation0]]
  $region30: #{tpu_custom_call.1} parent=0
    _
  %s8 = ssub.s32 1, %s6
  %s9 = scalar_select 0, %s8, %s6
  $region1: #{tpu_custom_call.1} parent=0
    #allocation2 [shape = 'u8[4096]{0}', space=vmem, size = 0x1000, scoped, tag = 'output window, operand 0, single buffered']
    #allocation3 [shape = 's32[1]{0}', space=sflag, size = 0x4, scoped, tag = 'scoped memory for tpu_custom_call.1']
    %10 = vsyncpa [#allocation3], 0
    // Predicated region
    $region2: #{tpu_custom_call.1} parent=1 // pred_check
      _
    $region3: #{tpu_custom_call.1} parent=1 // pred_check_branch
      %12 = sbr.rel (0) target = $region5
    $region4: #{tpu_custom_call.1} parent=1 // pred_region
      _
    $region5: #{tpu_custom_call.1} parent=1 // pred_fallthru
      _
    // Predicated region
    $region6: #{tpu_custom_call.1} parent=1 // pred_check
      _
    $region7: #{tpu_custom_call.1} parent=1 // pred_check_branch
      %14 = sbr.rel (0) target = $region9
    $region8: #{tpu_custom_call.1} parent=1 // pred_region
      _
    $region9: #{tpu_custom_call.1} parent=1 // pred_fallthru
      _
    // Predicated region
    $region10: #{tpu_custom_call.1} parent=1 // pred_check
      _
    $region11: #{tpu_custom_call.1} parent=1 // pred_check_branch
      %16 = sbr.rel (0) target = $region13
    $region12: #{tpu_custom_call.1} parent=1 // pred_region
      _
    $region13: #{tpu_custom_call.1} parent=1 // pred_fallthru
      _
    // Predicated region
    $region14: #{tpu_custom_call.1} parent=1 // pred_check
      _
    $region15: #{tpu_custom_call.1} parent=1 // pred_check_branch
      %18 = sbr.rel (0) target = $region17
    $region16: #{tpu_custom_call.1} parent=1 // pred_region
      _
    $region17: #{tpu_custom_call.1} parent=1 // pred_fallthru
      _
    // Predicated region
    $region18: #{tpu_custom_call.1} parent=1 // pred_check
      _
    $region19: #{tpu_custom_call.1} parent=1 // pred_check_branch
      %20 = sbr.rel (0) target = $region21
    $region20: #{tpu_custom_call.1} parent=1 // pred_region
      _
    $region21: #{tpu_custom_call.1} parent=1 // pred_fallthru
      _
    %v21 = vld [vmem:[%s0] sm:$0xff]
    %v22 = vld [vmem:[%s1] sm:$0xff]
    %v23 = vld [vmem:[%s1 + $0x8] sm:$0xff]
    %v24 = vld [vmem:[%s1 + $0x10] sm:$0xff]
    %v25 = vld [vmem:[%s1 + $0x18] sm:$0xff]
    %v26 = vld [vmem:[%s1 + $0x20] sm:$0xff]
    %v27 = vld [vmem:[%s1 + $0x28] sm:$0xff]
    %v28 = vld [vmem:[%s1 + $0x30] sm:$0xff]
    %v29 = vld [vmem:[%s1 + $0x38] sm:$0xff]
    %v30 = vld [vmem:[%s1 + $0x40] sm:$0xff]
    %v31 = vld [vmem:[%s1 + $0x48] sm:$0xff]
    %v32 = vld [vmem:[%s1 + $0x50] sm:$0xff]
    %v33 = vld [vmem:[%s1 + $0x58] sm:$0xff]
    %v34 = vld [vmem:[%s1 + $0x60] sm:$0xff]
    %v35 = vld [vmem:[%s1 + $0x68] sm:$0xff]
    %v36 = vld [vmem:[%s1 + $0x70] sm:$0x1]
    %vm37 = vcmask 924672
    %v39 = vsel %vm37, %v21, 0
    %vm41 = vcmask 1040384
    %v43 = vsel %vm41, %v36, 0
    %45 = vmatprep.subr.mxu0 0.0
    %46 = vmatpush1.msra.mxu0 %v22
    %47 = vmatprep.subr.mxu0 0.0
    %48 = vmatpush1.msra.mxu0 %v23
    %49 = vmatprep.subr.mxu0 0.0
    %50 = vmatpush1.msra.mxu0 %v24
    %51 = vmatprep.subr.mxu0 0.0
    %52 = vmatpush1.msra.mxu0 %v25
    %53 = vmatprep.subr.mxu0 0.0
    %54 = vmatpush1.msra.mxu0 %v26
    %55 = vmatprep.subr.mxu0 0.0
    %56 = vmatpush1.msra.mxu0 %v27
    %57 = vmatprep.subr.mxu0 0.0
    %58 = vmatpush1.msra.mxu0 %v28
    %59 = vmatprep.subr.mxu0 0.0
    %60 = vmatpush1.msra.mxu0 %v29
    %61 = vmatprep.subr.mxu0 0.0
    %62 = vmatpush1.msra.mxu0 %v30
    %63 = vmatprep.subr.mxu0 0.0
    %64 = vmatpush1.msra.mxu0 %v31
    %65 = vmatprep.subr.mxu0 0.0
    %66 = vmatpush1.msra.mxu0 %v32
    %67 = vmatprep.subr.mxu0 0.0
    %68 = vmatpush1.msra.mxu0 %v33
    %69 = vmatprep.subr.mxu0 0.0
    %70 = vmatpush1.msra.mxu0 %v34
    %71 = vmatprep.subr.mxu0 0.0
    %72 = vmatpush1.msra.mxu0 %v35
    %73 = vmatprep.subr.mxu0 0.0
    %74 = vmatpush1.msra.mxu0 %v43
    %75 = vmatprep.subr.mxu0 0.0
    %76 = vmatpush1.msra.mxu0 0.0
    %77 = vmatprep.subr.mxu0 0.0
    %78 = vmatpush1.msra.mxu0 0.0
    %79 = vmatprep.subr.mxu0 0.0
    %80 = vmatpush1.msra.mxu0 0.0
    %81 = vmatprep.subr.mxu0 0.0
    %82 = vmatpush1.msra.mxu0 0.0
    %83 = vmatprep.subr.mxu0 0.0
    %84 = vmatpush1.msra.mxu0 0.0
    %85 = vmatprep.subr.mxu0 0.0
    %86 = vmatpush1.msra.mxu0 0.0
    %87 = vmatprep.subr.mxu0 0.0
    %88 = vmatpush1.msra.mxu0 0.0
    %89 = vmatprep.subr.mxu0 0.0
    %90 = vmatpush1.msra.mxu0 0.0
    %91 = vmatprep.subr.mxu0 0.0
    %92 = vmatpush1.msra.mxu0 0.0
    %93 = vmatprep.subr.mxu0 0.0
    %94 = vmatpush1.msra.mxu0 0.0
    %95 = vmatprep.subr.mxu0 0.0
    %96 = vmatpush1.msra.mxu0 0.0
    %97 = vmatprep.subr.mxu0 0.0
    %98 = vmatpush1.msra.mxu0 0.0
    %99 = vmatprep.subr.mxu0 0.0
    %100 = vmatpush1.msra.mxu0 0.0
    %101 = vmatprep.subr.mxu0 0.0
    %102 = vmatpush1.msra.mxu0 0.0
    %103 = vmatprep.subr.mxu0 0.0
    %104 = vmatpush1.msra.mxu0 0.0
    %105 = vmatprep.subr.mxu0 0.0
    %106 = vmatpush1.msra.mxu0 0.0
    %107 = vmatprep.subr.mxu0 0.0
    %108 = vmatpush1.msra.mxu0 0.0
    %109 = vmatprep.mubr.f32.mxu0 0.0
    %110 = vmatmul.mubr.f32.gmra.mrb[0].mxu0 %v39
    %v111 = vpop.f32.mrb[0].mxu0
    %v112 = vadd.f32 0.0, %v111
    %v113 = vpop.f32.mrb[0].mxu0
    %114 = vdwg.mxu0
    %116 = vrot.lane.b32.xlu0 %v112, 120
    %v117 = vpop.permute.xlu0 %116
    %v119 = vmax.f32 %v112, %v117
    %v120 = vsub.f32 %v112, %v119
    %v121 = vmul.f32 %v120, 1.442695
    %v122 = vpow.pop %v121
    %124 = vrot.lane.b32.xlu0 %v119, 8
    %v125 = vpop.permute.xlu0 %124
    %v127 = vsub.f32 %v112, %v125
    %v128 = vmul.f32 %v127, 1.442695
    %v129 = vpow.pop %v128
    %131 = vrot.lane.b32.xlu0 %v129, 120
    %v132 = vpop.permute.xlu0 %131
    %v134 = vadd.f32 %v122, %v132
    %v135 = vrcp.pop %v134
    %v136 = vmul.f32 %v122, %v135
    %138 = vrot.lane.b32.xlu0 %v135, 8
    %v139 = vpop.permute.xlu0 %138
    %v141 = vmul.f32 %v129, %v139
    %143 = vrot.lane.b32.xlu0 %v136, 64
    %v144 = vpop.permute.xlu0 %143
    %147 = vrot.lane.b32.xlu0 %v141, 64
    %v148 = vpop.permute.xlu0 %147
    %vm150 = vcmask 64512
    %v151 = vsel %vm150, %v144, %v148
    %v152 = vld [vmem:[%s2] sm:$0xff]
    %v153 = vld [vmem:[%s2 + $0x8] sm:$0xff]
    %vm154 = vcmask 130048
    %v156 = vsel %vm154, %v151, 0
    %158 = vmatprep.subr.mxu0 0.0
    %159 = vmatpush1.msra.mxu0 %v152
    %160 = vmatprep.subr.mxu0 0.0
    %161 = vmatpush1.msra.mxu0 %v153
    %162 = vmatprep.subr.mxu0 0.0
    %163 = vmatpush1.msra.mxu0 0.0
    %164 = vmatprep.subr.mxu0 0.0
    %165 = vmatpush1.msra.mxu0 0.0
    %166 = vmatprep.subr.mxu0 0.0
    %167 = vmatpush1.msra.mxu0 0.0
    %168 = vmatprep.subr.mxu0 0.0
    %169 = vmatpush1.msra.mxu0 0.0
    %170 = vmatprep.subr.mxu0 0.0
    %171 = vmatpush1.msra.mxu0 0.0
    %172 = vmatprep.subr.mxu0 0.0
    %173 = vmatpush1.msra.mxu0 0.0
    %174 = vmatprep.subr.mxu0 0.0
    %175 = vmatpush1.msra.mxu0 0.0
    %176 = vmatprep.subr.mxu0 0.0
    %177 = vmatpush1.msra.mxu0 0.0
    %178 = vmatprep.subr.mxu0 0.0
    %179 = vmatpush1.msra.mxu0 0.0
    %180 = vmatprep.subr.mxu0 0.0
    %181 = vmatpush1.msra.mxu0 0.0
    %182 = vmatprep.subr.mxu0 0.0
    %183 = vmatpush1.msra.mxu0 0.0
    %184 = vmatprep.subr.mxu0 0.0
    %185 = vmatpush1.msra.mxu0 0.0
    %186 = vmatprep.subr.mxu0 0.0
    %187 = vmatpush1.msra.mxu0 0.0
    %188 = vmatprep.subr.mxu0 0.0
    %189 = vmatpush1.msra.mxu0 0.0
    %190 = vmatprep.subr.mxu0 0.0
    %191 = vmatpush1.msra.mxu0 0.0
    %192 = vmatprep.subr.mxu0 0.0
    %193 = vmatpush1.msra.mxu0 0.0
    %194 = vmatprep.subr.mxu0 0.0
    %195 = vmatpush1.msra.mxu0 0.0
    %196 = vmatprep.subr.mxu0 0.0
    %197 = vmatpush1.msra.mxu0 0.0
    %198 = vmatprep.subr.mxu0 0.0
    %199 = vmatpush1.msra.mxu0 0.0
    %200 = vmatprep.subr.mxu0 0.0
    %201 = vmatpush1.msra.mxu0 0.0
    %202 = vmatprep.subr.mxu0 0.0
    %203 = vmatpush1.msra.mxu0 0.0
    %204 = vmatprep.subr.mxu0 0.0
    %205 = vmatpush1.msra.mxu0 0.0
    %206 = vmatprep.subr.mxu0 0.0
    %207 = vmatpush1.msra.mxu0 0.0
    %208 = vmatprep.subr.mxu0 0.0
    %209 = vmatpush1.msra.mxu0 0.0
    %210 = vmatprep.subr.mxu0 0.0
    %211 = vmatpush1.msra.mxu0 0.0
    %212 = vmatprep.subr.mxu0 0.0
    %213 = vmatpush1.msra.mxu0 0.0
    %214 = vmatprep.subr.mxu0 0.0
    %215 = vmatpush1.msra.mxu0 0.0
    %216 = vmatprep.subr.mxu0 0.0
    %217 = vmatpush1.msra.mxu0 0.0
    %218 = vmatprep.subr.mxu0 0.0
    %219 = vmatpush1.msra.mxu0 0.0
    %220 = vmatprep.subr.mxu0 0.0
    %221 = vmatpush1.msra.mxu0 0.0
    %222 = vmatprep.mubr.f32.mxu0 0.0
    %223 = vmatmul.mubr.f32.gmra.mrb[0].mxu0 %v156
    %v224 = vpop.f32.mrb[0].mxu0
    %v225 = vadd.f32 0.0, %v224
    %v226 = vpop.f32.mrb[0].mxu0
    %227 = vdwg.mxu0
    %v228 = vmul.f32 %v225, %v112
    %v229 = vld [vmem:[%s3] sm:$0xff]
    %v230 = vld [vmem:[%s3 + $0x8] sm:$0xff]
    %v231 = vld [vmem:[%s3 + $0x10] sm:$0xff]
    %v232 = vld [vmem:[%s3 + $0x18] sm:$0xff]
    %v233 = vld [vmem:[%s3 + $0x20] sm:$0xff]
    %v234 = vld [vmem:[%s3 + $0x28] sm:$0xff]
    %v235 = vld [vmem:[%s3 + $0x30] sm:$0xff]
    %v236 = vld [vmem:[%s3 + $0x38] sm:$0xff]
    %v237 = vld [vmem:[%s4] sm:$0x1]
    %v239 = vlaneseq
    %v240 = vshrl.u32 %v239, 7
    %v241 = vsub.s32 0, %v240
    %v242 = vrot.slane %v237, %v241
    %vm244 = vcmask 523264
    %v246 = vsel %vm244, %v228, 0
    %248 = vmatprep.subr.mxu0 0.0
    %249 = vmatpush1.msra.mxu0 %v229
    %250 = vmatprep.subr.mxu0 0.0
    %251 = vmatpush1.msra.mxu0 %v230
    %252 = vmatprep.subr.mxu0 0.0
    %253 = vmatpush1.msra.mxu0 %v231
    %254 = vmatprep.subr.mxu0 0.0
    %255 = vmatpush1.msra.mxu0 %v232
    %256 = vmatprep.subr.mxu0 0.0
    %257 = vmatpush1.msra.mxu0 %v233
    %258 = vmatprep.subr.mxu0 0.0
    %259 = vmatpush1.msra.mxu0 %v234
    %260 = vmatprep.subr.mxu0 0.0
    %261 = vmatpush1.msra.mxu0 %v235
    %262 = vmatprep.subr.mxu0 0.0
    %263 = vmatpush1.msra.mxu0 %v236
    %264 = vmatprep.subr.mxu0 0.0
    %265 = vmatpush1.msra.mxu0 0.0
    %266 = vmatprep.subr.mxu0 0.0
    %267 = vmatpush1.msra.mxu0 0.0
    %268 = vmatprep.subr.mxu0 0.0
    %269 = vmatpush1.msra.mxu0 0.0
    %270 = vmatprep.subr.mxu0 0.0
    %271 = vmatpush1.msra.mxu0 0.0
    %272 = vmatprep.subr.mxu0 0.0
    %273 = vmatpush1.msra.mxu0 0.0
    %274 = vmatprep.subr.mxu0 0.0
    %275 = vmatpush1.msra.mxu0 0.0
    %276 = vmatprep.subr.mxu0 0.0
    %277 = vmatpush1.msra.mxu0 0.0
    %278 = vmatprep.subr.mxu0 0.0
    %279 = vmatpush1.msra.mxu0 0.0
    %280 = vmatprep.subr.mxu0 0.0
    %281 = vmatpush1.msra.mxu0 0.0
    %282 = vmatprep.subr.mxu0 0.0
    %283 = vmatpush1.msra.mxu0 0.0
    %284 = vmatprep.subr.mxu0 0.0
    %285 = vmatpush1.msra.mxu0 0.0
    %286 = vmatprep.subr.mxu0 0.0
    %287 = vmatpush1.msra.mxu0 0.0
    %288 = vmatprep.subr.mxu0 0.0
    %289 = vmatpush1.msra.mxu0 0.0
    %290 = vmatprep.subr.mxu0 0.0
    %291 = vmatpush1.msra.mxu0 0.0
    %292 = vmatprep.subr.mxu0 0.0
    %293 = vmatpush1.msra.mxu0 0.0
    %294 = vmatprep.subr.mxu0 0.0
    %295 = vmatpush1.msra.mxu0 0.0
    %296 = vmatprep.subr.mxu0 0.0
    %297 = vmatpush1.msra.mxu0 0.0
    %298 = vmatprep.subr.mxu0 0.0
    %299 = vmatpush1.msra.mxu0 0.0
    %300 = vmatprep.subr.mxu0 0.0
    %301 = vmatpush1.msra.mxu0 0.0
    %302 = vmatprep.subr.mxu0 0.0
    %303 = vmatpush1.msra.mxu0 0.0
    %304 = vmatprep.subr.mxu0 0.0
    %305 = vmatpush1.msra.mxu0 0.0
    %306 = vmatprep.subr.mxu0 0.0
    %307 = vmatpush1.msra.mxu0 0.0
    %308 = vmatprep.subr.mxu0 0.0
    %309 = vmatpush1.msra.mxu0 0.0
    %310 = vmatprep.subr.mxu0 0.0
    %311 = vmatpush1.msra.mxu0 0.0
    %312 = vmatprep.mubr.f32.mxu0 0.0
    %313 = vmatmul.mubr.f32.gmra.mrb[0].mxu0 %v246
    %v314 = vpop.f32.mrb[0].mxu0
    %v315 = vadd.f32 %v242, %v314
    %v316 = vpop.f32.mrb[0].mxu0
    %317 = vdwg.mxu0
    %vm318 = vcmask 261120
    %319 = vst.msk [vmem:[#allocation2] sm:$0xff] %vm318, %v315
    // Predicated region
    $region22: #{tpu_custom_call.1} parent=1 // pred_check
      _
    $region23: #{tpu_custom_call.1} parent=1 // pred_check_branch
      %321 = sbr.rel (0) target = $region25
    $region24: #{tpu_custom_call.1} parent=1 // pred_region
      %s323 = ssub.s32 128, 128
      %324 = vsyncadd [#allocation3], %s323
      %s326 = sshll.u32 [#allocation2], 4
      %s327 = int_to_ptr.vmem [resolvable:$true] %s326
      %329 = dma.vmem_to_hbm [thread:$0]  %s327, 128, %s5, [#allocation3]
    $region25: #{tpu_custom_call.1} parent=1 // pred_fallthru
      _
    // Predicated region
    $region26: #{tpu_custom_call.1} parent=1 // pred_check
      _
    $region27: #{tpu_custom_call.1} parent=1 // pred_check_branch
      %331 = sbr.rel (0) target = $region29
    $region28: #{tpu_custom_call.1} parent=1 // pred_region
      %332 = dma.done [#allocation3], 128
    $region29: #{tpu_custom_call.1} parent=1 // pred_fallthru
      _
    %333 = vsyncpa [#allocation3], 1

</llo_original>
